<compile_context>
chip_gen: v7x
topology: tpu7x:2x2x1
jax: 0.10.0
libtpu: 0.0.40
codegen_flags: <defaults>
</compile_context>

<pallas_src>
import math

import jax
import jax.numpy as jnp
from jax import lax
from jax.experimental import pallas as pl
from jax.experimental.pallas import tpu as pltpu


def _round_up(n, m):
    return ((n + m - 1) // m) * m


def _make_kernel(k_rem, has_bias):
    """Build the (o, k)-grid kernel body.

    k_rem    : K % tk (static).  If nonzero, the last K tile is masked in-kernel
               (replaces wrapper-side zero-padding of x / weight).
    has_bias : static flag; when False no bias ref is passed at all.
    """

    def kernel(*refs):
        if has_bias:
            x_ref, w_ref, b_ref, o_ref, xs_ref, ws_ref = refs
        else:
            x_ref, w_ref, o_ref, xs_ref, ws_ref = refs
            b_ref = None

        k = pl.program_id(1)
        n_k = pl.num_programs(1)

        @pl.when(k == 0)
        def _():
            xs_ref[...] = jnp.zeros_like(xs_ref)
            ws_ref[...] = jnp.zeros_like(ws_ref)

        xv = x_ref[...]          # (B,  tk) input slab
        wv = w_ref[...]          # (to, tk) weight slab, natural (OUT, K) layout
        tk = xv.shape[-1]

        if k_rem:
            # Mask the K-padding lanes of the last tile (cheap VPU select,
            # completely hidden under the HBM stream).
            limit = jnp.where(k == n_k - 1, k_rem, tk)
            lane_x = lax.broadcasted_iota(jnp.int32, xv.shape, 1)
            lane_w = lax.broadcasted_iota(jnp.int32, wv.shape, 1)
            xv = jnp.where(lane_x < limit, xv, 0)
            wv = jnp.where(lane_w < limit, wv, 0)

        # rowsum(x) partial: tiny (B, 1) reduce (XLU), f32 accumulation.
        xs_ref[...] += jnp.sum(xv.astype(jnp.float32), axis=-1, keepdims=True)

        # rowsum(weight) partial on the otherwise-idle MXU:
        #   ones(8, tk) . weight(to, tk)^T -> (8, to), every row identical and
        #   lane-dense; no transpose is materialized (contraction on rhs dim 1).
        ones = jnp.ones((8, tk), dtype=wv.dtype)
        ws_ref[...] += lax.dot_general(
            ones, wv,
            dimension_numbers=(((1,), (1,)), ((), ())),
            preferred_element_type=jnp.float32,
        )

        @pl.when(k == n_k - 1)
        def _():
            # Single (B,1)+(1,to) broadcast add, optional bias multiply,
            # lane-dense output store.
            out = xs_ref[...] + ws_ref[0:1, :]
            if has_bias:
                out = out * b_ref[...].astype(jnp.float32)
            o_ref[...] = out.astype(o_ref.dtype)

    return kernel


def linear_adder_v2(x, weight, bias=None):
    """x: (B, K), weight: (OUT, K), bias: (OUT,) or None -> (B, OUT)."""
    B, K = x.shape
    OUT, K2 = weight.shape
    assert K == K2
    if bias is not None:
        assert bias.shape == (OUT,)
    out_dtype = x.dtype
    has_bias = bias is not None

    # ---- Generation-aware VMEM budget (v7x: 64 MiB phys, v5e/v6e: 128 MiB) ----
    try:
        vmem_cap = int(pltpu.get_tpu_info().vmem_capacity_bytes)
    except Exception:
        vmem_cap = 64 * 1024 * 1024
    if not vmem_cap or vmem_cap <= 0:
        vmem_cap = 64 * 1024 * 1024
    # One number for both the tk derivation and the compiler limit:
    # ~48 MiB on v7x, ~96 MiB on v5e/v6e.
    vmem_limit = min(vmem_cap * 3 // 4, vmem_cap - 8 * 1024 * 1024)

    # ---- OUT tiling: lane-dense; >=2 "parallel" tiles whenever OUT >= 256 so
    #      both v7x TensorCores share the weight stream. ----
    to = min(2048, max(128, _round_up(pl.cdiv(OUT, 2), 128)))
    n_out_tiles = pl.cdiv(OUT, to)

    # ---- K tiling: largest 128-multiple the budget allows (double-buffered) ----
    in_bytes = jnp.dtype(x.dtype).itemsize
    w_bytes = jnp.dtype(weight.dtype).itemsize
    out_bytes = jnp.dtype(out_dtype).itemsize
    b_bytes = jnp.dtype(bias.dtype).itemsize if has_bias else 0
    fixed = (2 * B * to * out_bytes              # double-buffered output tile
             + 2 * to * b_bytes                  # double-buffered bias tile
             + (max(B, 8) * 128 + 8 * to) * 4    # padded f32 accumulators
             + 2 * 1024 * 1024)                  # compiler internal scratch headroom
    avail = vmem_limit - fixed
    per_k = 2 * (B * in_bytes + to * w_bytes)    # x + weight slabs, double-buffered
    tk = max(128, (avail // per_k) // 128 * 128) if avail > per_k * 128 else 128
    tk = min(tk, _round_up(K, 128))
    n_k_tiles = pl.cdiv(K, tk)
    k_rem = K % tk

    kernel = _make_kernel(k_rem, has_bias)

    in_specs = [
        pl.BlockSpec((B, tk), lambda o, k: (0, k)),    # x slab (re-read per o tile)
        pl.BlockSpec((to, tk), lambda o, k: (o, k)),   # weight slab, natural layout
    ]
    inputs = [x, weight]
    if has_bias:
        in_specs.append(pl.BlockSpec((1, to), lambda o, k: (0, o)))
        inputs.append(bias.reshape(1, OUT))

    return pl.pallas_call(
        kernel,
        out_shape=jax.ShapeDtypeStruct((B, OUT), out_dtype),
        grid_spec=pltpu.PrefetchScalarGridSpec(
            num_scalar_prefetch=0,
            grid=(n_out_tiles, n_k_tiles),
            in_specs=in_specs,
            out_specs=pl.BlockSpec((B, to), lambda o, k: (0, o)),
            scratch_shapes=[
                pltpu.VMEM((B, 1), jnp.float32),   # rowsum(x) accumulator
                pltpu.VMEM((8, to), jnp.float32),  # rowsum(weight) accumulator
            ],
        ),
        compiler_params=pltpu.CompilerParams(
            dimension_semantics=("parallel", "arbitrary"),
            vmem_limit_bytes=int(vmem_limit),
        ),
        cost_estimate=pl.CostEstimate(
            flops=2 * 8 * OUT * K + n_out_tiles * B * K + 3 * B * OUT,
            transcendentals=0,
            bytes_accessed=(n_out_tiles * B * K * in_bytes   # x re-read per OUT tile
                            + OUT * K * w_bytes
                            + OUT * b_bytes
                            + B * OUT * out_bytes),
        ),
    )(*inputs)


def init_params(key, in_features, out_features, with_bias=True):
    """Deterministic re-implementation of LinearAdderV2.reset_parameters()."""
    kw, kb = jax.random.split(key)
    # kaiming_uniform_(a=sqrt(5)) on (out, in) -> U(-1/sqrt(fan_in), 1/sqrt(fan_in))
    bound = 1.0 / math.sqrt(in_features)
    weight = jax.random.uniform(
        kw, (out_features, in_features), jnp.float32, minval=-bound, maxval=bound
    )
    bias = None
    if with_bias:
        bias = jax.random.uniform(
            kb, (out_features,), jnp.float32, minval=-bound, maxval=bound
        )
    return weight, bias


def reference(x, weight, bias):
    # Direct transcription of the PyTorch forward (materializes (B, OUT, K)).
    out = jnp.sum(x[:, None, :] + weight[None, :, :], axis=2)
    if bias is not None:
        out = out * bias[None, :]
    return out


if __name__ == "__main__":
    key = jax.random.PRNGKey(0)
    k_x, k_p, k_x2, k_p2 = jax.random.split(key, 4)

    # --- primary (tile-aligned) shapes ---
    B, IN_FEATURES, OUT_FEATURES = 8, 256, 128
    x = jax.random.normal(k_x, (B, IN_FEATURES), jnp.float32)
    weight, bias = init_params(k_p, IN_FEATURES, OUT_FEATURES)

    out = jax.block_until_ready(linear_adder_v2(x, weight, bias))
    ref = reference(x, weight, bias)
    assert out.shape == (B, OUT_FEATURES)
    assert jnp.allclose(out, ref, atol=1e-3, rtol=1e-3), (
        f"max abs err {jnp.max(jnp.abs(out - ref))}"
    )

    # bias=None path (module's register_parameter('bias', None) branch)
    out_nb = jax.block_until_ready(linear_adder_v2(x, weight, None))
    ref_nb = reference(x, weight, None)
    assert jnp.allclose(out_nb, ref_nb, atol=1e-3, rtol=1e-3), (
        f"max abs err (no bias) {jnp.max(jnp.abs(out_nb - ref_nb))}"
    )

    # --- odd, non-tile-aligned shapes: exercises the in-kernel K masking and
    #     the masked edge-block output store (no wrapper-side padding). ---
    B2, IN2, OUT2 = 4, 200, 100
    x2 = jax.random.normal(k_x2, (B2, IN2), jnp.float32)
    weight2, bias2 = init_params(k_p2, IN2, OUT2)
    out2 = jax.block_until_ready(linear_adder_v2(x2, weight2, bias2))
    ref2 = reference(x2, weight2, bias2)
    assert out2.shape == (B2, OUT2)
    assert jnp.allclose(out2, ref2, atol=1e-3, rtol=1e-3), (
        f"max abs err (odd shapes) {jnp.max(jnp.abs(out2 - ref2))}"
    )

    print("KERNEL_OK")
</pallas_src>

<mosaic_0001>
module attributes {stable_mosaic.version = 11 : i64} {
  func.func @kernel(%arg0: i32, %arg1: i32, %arg2: memref<8x256xf32, #tpu.memory_space<vmem>>, %arg3: memref<128x256xf32, #tpu.memory_space<vmem>>, %arg4: memref<1x128xf32, #tpu.memory_space<vmem>>, %arg5: memref<8x128xf32, #tpu.memory_space<vmem>>, %arg6: memref<8x1xf32, #tpu.memory_space<vmem>>, %arg7: memref<8x128xf32, #tpu.memory_space<vmem>>) attributes {dimension_semantics = [#tpu.dimension_semantics<parallel>, #tpu.dimension_semantics<arbitrary>], iteration_bounds = array<i64: 1, 1>, scalar_prefetch = 0 : i64, scratch_operands = 2 : i64, tpu.core_type = #tpu.core_type<tc>, window_params = [{transform_indices = @transform_0, window_bounds = array<i64: 8, 256>}, {transform_indices = @transform_1, window_bounds = array<i64: 128, 256>}, {transform_indices = @transform_2, window_bounds = array<i64: 1, 128>}, {transform_indices = @transform_3, window_bounds = array<i64: 8, 128>}]} {
    %c0_i32 = arith.constant 0 : i32
    %0 = arith.cmpi eq, %arg1, %c0_i32 : i32
    %1 = arith.extui %0 : i1 to i32
    %c0_i32_0 = arith.constant 0 : i32
    %2 = arith.cmpi ne, %1, %c0_i32_0 : i32
    scf.if %2 {
      %cst_16 = arith.constant 0.000000e+00 : f32
      %18 = vector.broadcast %cst_16 : f32 to vector<8x1xf32>
      %c0_17 = arith.constant 0 : index
      %c0_18 = arith.constant 0 : index
      %19 = vector.load %arg6[%c0_17, %c0_18] : memref<8x1xf32, #tpu.memory_space<vmem>>, vector<8x1xf32>
      tpu.vector_store %arg6[%c0_17, %c0_18], %18 {strides = array<i32>} : memref<8x1xf32, #tpu.memory_space<vmem>>, vector<8x1xf32>,
      %cst_19 = arith.constant 0.000000e+00 : f32
      %20 = vector.broadcast %cst_19 : f32 to vector<8x128xf32>
      %c0_20 = arith.constant 0 : index
      %c0_21 = arith.constant 0 : index
      %21 = vector.load %arg7[%c0_20, %c0_21] : memref<8x128xf32, #tpu.memory_space<vmem>>, vector<8x128xf32>
      tpu.vector_store %arg7[%c0_20, %c0_21], %20 {strides = array<i32>} : memref<8x128xf32, #tpu.memory_space<vmem>>, vector<8x128xf32>,
    } else {
    }
    %c0 = arith.constant 0 : index
    %c0_1 = arith.constant 0 : index
    %3 = vector.load %arg2[%c0, %c0_1] : memref<8x256xf32, #tpu.memory_space<vmem>>, vector<8x256xf32>
    %c0_2 = arith.constant 0 : index
    %c0_3 = arith.constant 0 : index
    %4 = vector.load %arg3[%c0_2, %c0_3] : memref<128x256xf32, #tpu.memory_space<vmem>>, vector<128x256xf32>
    %c0_4 = arith.constant 0 : index
    %c0_5 = arith.constant 0 : index
    %5 = vector.load %arg6[%c0_4, %c0_5] : memref<8x1xf32, #tpu.memory_space<vmem>>, vector<8x1xf32>
    %cst = arith.constant dense<0.000000e+00> : vector<8xf32>
    %6 = vector.multi_reduction <add>, %3, %cst [1] : vector<8x256xf32> to vector<8xf32>
    %7 = vector.shape_cast %6 : vector<8xf32> to vector<8x1xf32>
    %8 = arith.addf %5, %7 : vector<8x1xf32>
    %c0_6 = arith.constant 0 : index
    %c0_7 = arith.constant 0 : index
    %9 = vector.load %arg6[%c0_6, %c0_7] : memref<8x1xf32, #tpu.memory_space<vmem>>, vector<8x1xf32>
    tpu.vector_store %arg6[%c0_6, %c0_7], %8 {strides = array<i32>} : memref<8x1xf32, #tpu.memory_space<vmem>>, vector<8x1xf32>,
    %cst_8 = arith.constant 1.000000e+00 : f32
    %10 = vector.broadcast %cst_8 : f32 to vector<8x256xf32>
    %c0_9 = arith.constant 0 : index
    %c0_10 = arith.constant 0 : index
    %11 = vector.load %arg7[%c0_9, %c0_10] : memref<8x128xf32, #tpu.memory_space<vmem>>, vector<8x128xf32>
    %cst_11 = arith.constant dense<0.000000e+00> : vector<8x128xf32>
    %12 = tpu.matmul %10, %4, %cst_11 {dimension_numbers = #tpu.dot_dimension_numbers<[1], [1], [0], [0], [0, 0, 1, 0], [], []>} : vector<8x256xf32>, vector<128x256xf32>, vector<8x128xf32> -> vector<8x128xf32>
    %13 = arith.addf %11, %12 : vector<8x128xf32>
    %c0_12 = arith.constant 0 : index
    %c0_13 = arith.constant 0 : index
    %14 = vector.load %arg7[%c0_12, %c0_13] : memref<8x128xf32, #tpu.memory_space<vmem>>, vector<8x128xf32>
    tpu.vector_store %arg7[%c0_12, %c0_13], %13 {strides = array<i32>} : memref<8x128xf32, #tpu.memory_space<vmem>>, vector<8x128xf32>,
    %c0_i32_14 = arith.constant 0 : i32
    %15 = arith.cmpi eq, %arg1, %c0_i32_14 : i32
    %16 = arith.extui %15 : i1 to i32
    %c0_i32_15 = arith.constant 0 : i32
    %17 = arith.cmpi ne, %16, %c0_i32_15 : i32
    scf.if %17 {
      %c0_16 = arith.constant 0 : index
      %c0_17 = arith.constant 0 : index
      %18 = vector.load %arg6[%c0_16, %c0_17] : memref<8x1xf32, #tpu.memory_space<vmem>>, vector<8x1xf32>
      %c0_18 = arith.constant 0 : index
      %c0_19 = arith.constant 0 : index
      %19 = vector.load %arg7[%c0_18, %c0_19] : memref<8x128xf32, #tpu.memory_space<vmem>>, vector<1x128xf32>
      %20 = vector.broadcast %18 : vector<8x1xf32> to vector<8x128xf32>
      %21 = vector.broadcast %19 : vector<1x128xf32> to vector<8x128xf32>
      %22 = arith.addf %20, %21 : vector<8x128xf32>
      %c0_20 = arith.constant 0 : index
      %c0_21 = arith.constant 0 : index
      %23 = vector.load %arg4[%c0_20, %c0_21] : memref<1x128xf32, #tpu.memory_space<vmem>>, vector<1x128xf32>
      %24 = vector.broadcast %23 : vector<1x128xf32> to vector<8x128xf32>
      %25 = arith.mulf %22, %24 : vector<8x128xf32>
      %c0_22 = arith.constant 0 : index
      %c0_23 = arith.constant 0 : index
      %26 = vector.load %arg5[%c0_22, %c0_23] : memref<8x128xf32, #tpu.memory_space<vmem>>, vector<8x128xf32>
      tpu.vector_store %arg5[%c0_22, %c0_23], %25 {strides = array<i32>} : memref<8x128xf32, #tpu.memory_space<vmem>>, vector<8x128xf32>,
    } else {
    }
    return
  }
  func.func @transform_0(%arg0: i32, %arg1: i32) -> (i32, i32) {
    %c0_i32 = arith.constant 0 : i32
    %c0_i32_0 = arith.constant 0 : i32
    return %c0_i32, %arg1 : i32, i32
  }
  func.func @transform_1(%arg0: i32, %arg1: i32) -> (i32, i32) {
    %c0_i32 = arith.constant 0 : i32
    return %arg0, %arg1 : i32, i32
  }
  func.func @transform_2(%arg0: i32, %arg1: i32) -> (i32, i32) {
    %c0_i32 = arith.constant 0 : i32
    %c0_i32_0 = arith.constant 0 : i32
    return %c0_i32, %arg0 : i32, i32
  }
  func.func @transform_3(%arg0: i32, %arg1: i32) -> (i32, i32) {
    %c0_i32 = arith.constant 0 : i32
    %c0_i32_0 = arith.constant 0 : i32
    return %c0_i32, %arg0 : i32, i32
  }
}

</mosaic_0001>

<llo_original>
// kernel: tpu_custom_call.1
$region0: #{tpu_custom_call.1}
  #allocation0 [shape = 'u32[]', space=smem, size = 0x4, offset = 0x4, fixed_abs, tag = 'smem constant byte address 0x4 - core index']
  #allocation1 [shape = 'u32[144,128]{1,0:T(1,128)}', space=vmem, size = 0x12000, scoped, tag = 'internal scratch']
  #allocation2 [shape = 'f32[8,1]{1,0:T(8,128)}', space=vmem, size = 0x1000, scoped, tag = 'scratch operand']
  #allocation3 [shape = 'f32[8,128]{1,0:T(8,128)}', space=vmem, size = 0x1000, scoped, tag = 'scratch operand']
  %s0 = inlined_call_operand.hbm [shape: f32[8,256], index: 0, kind: input, shape index: {}]
  %s1 = inlined_call_operand.hbm [shape: f32[128,256], index: 1, kind: input, shape index: {}]
  %s2 = inlined_call_operand.vmem [shape: f32[1,128], index: 2, kind: input, shape index: {}]
  %s3 = inlined_call_operand.hbm [shape: f32[8,128], index: 3, kind: output, shape index: {}]
  %s4 = sld [smem:[#allocation0]]
  $region38: #{tpu_custom_call.1} parent=0
    _
  %s6 = ssub.s32 1, %s4
  %s7 = scalar_select 0, %s6, %s4
  $region1: #{tpu_custom_call.1} parent=0
    #allocation4 [shape = 'u8[8192]{0}', space=vmem, size = 0x2000, scoped, tag = 'input window, operand 0, single buffered']
    #allocation5 [shape = 's32[1]{0}', space=sflag, size = 0x4, scoped, tag = 'scoped memory for tpu_custom_call.1']
    #allocation6 [shape = 's32[1]{0}', space=sflag, size = 0x4, scoped, tag = 'scoped memory for tpu_custom_call.1']
    #allocation7 [shape = 'u8[131072]{0}', space=vmem, size = 0x20000, scoped, tag = 'input window, operand 1, single buffered']
    #allocation8 [shape = 's32[1]{0}', space=sflag, size = 0x4, scoped, tag = 'scoped memory for tpu_custom_call.1']
    #allocation9 [shape = 'u8[4096]{0}', space=vmem, size = 0x1000, scoped, tag = 'output window, operand 0, single buffered']
    %8 = vsyncpa [#allocation5], 0
    %9 = vsyncpa [#allocation8], 0
    %10 = vsyncpa [#allocation6], 0
    // Predicated region
    $region2: #{tpu_custom_call.1} parent=1 // pred_check
      _
    $region3: #{tpu_custom_call.1} parent=1 // pred_check_branch
      %12 = sbr.rel (0) target = $region5
    $region4: #{tpu_custom_call.1} parent=1 // pred_region
      %s14 = ssub.s32 256, 256
      %15 = vsyncadd [#allocation5], %s14
      %s17 = sshll.u32 [#allocation4], 4
      %s18 = int_to_ptr.vmem [resolvable:$true] %s17
      %20 = dma.hbm_to_vmem [thread:$0]  %s0, 256, %s18, [#allocation5]
    $region5: #{tpu_custom_call.1} parent=1 // pred_fallthru
      _
    // Predicated region
    $region6: #{tpu_custom_call.1} parent=1 // pred_check
      _
    $region7: #{tpu_custom_call.1} parent=1 // pred_check_branch
      %22 = sbr.rel (0) target = $region9
    $region8: #{tpu_custom_call.1} parent=1 // pred_region
      %s24 = ssub.s32 4096, 4096
      %25 = vsyncadd [#allocation8], %s24
      %s26 = sshll.u32 [#allocation7], 4
      %s27 = int_to_ptr.vmem [resolvable:$true] %s26
      %32 = dma.hbm_to_vmem [thread:$0]  %s1, 4096, %s27, [#allocation8], 256, 256, 16
    $region9: #{tpu_custom_call.1} parent=1 // pred_fallthru
      _
    // Predicated region
    $region10: #{tpu_custom_call.1} parent=1 // pred_check
      _
    $region11: #{tpu_custom_call.1} parent=1 // pred_check_branch
      %34 = sbr.rel (0) target = $region13
    $region12: #{tpu_custom_call.1} parent=1 // pred_region
      _
    $region13: #{tpu_custom_call.1} parent=1 // pred_fallthru
      _
    // Predicated region
    $region14: #{tpu_custom_call.1} parent=1 // pred_check
      _
    $region15: #{tpu_custom_call.1} parent=1 // pred_check_branch
      %36 = sbr.rel (0) target = $region17
    $region16: #{tpu_custom_call.1} parent=1 // pred_region
      %37 = dma.done [#allocation5], 256
    $region17: #{tpu_custom_call.1} parent=1 // pred_fallthru
      _
    // Predicated region
    $region18: #{tpu_custom_call.1} parent=1 // pred_check
      _
    $region19: #{tpu_custom_call.1} parent=1 // pred_check_branch
      %39 = sbr.rel (0) target = $region21
    $region20: #{tpu_custom_call.1} parent=1 // pred_region
      %40 = dma.done [#allocation8], 4096
    $region21: #{tpu_custom_call.1} parent=1 // pred_fallthru
      _
    %p41 = scmp.eq.s32.totalorder 0, 0
    // Predicated region
    $region22: #{tpu_custom_call.1} parent=1 // pred_check
      %p42 = pneg %p41
    $region23: #{tpu_custom_call.1} parent=1 // pred_check_branch
      %44 = sbr.rel (%p42) target = $region25
    $region24: #{tpu_custom_call.1} parent=1 // pred_region
      %vm45 = vcmask 7168
      %46 = vst.msk [vmem:[#allocation2] sm:$0xff] %vm45, 0.0
      %47 = vst [vmem:[#allocation3] sm:$0xff] 0.0
    $region25: #{tpu_custom_call.1} parent=1 // pred_fallthru
      _
    %v48 = vld [vmem:[#allocation4] sm:$0xff]
    %v49 = vld [vmem:[#allocation4 + $0x8] sm:$0xff]
    %v50 = vld [vmem:[#allocation7] sm:$0xff]
    %v51 = vld [vmem:[#allocation7 + $0x8] sm:$0xff]
    %v52 = vld [vmem:[#allocation7 + $0x10] sm:$0xff]
    %v53 = vld [vmem:[#allocation7 + $0x18] sm:$0xff]
    %v54 = vld [vmem:[#allocation7 + $0x20] sm:$0xff]
    %v55 = vld [vmem:[#allocation7 + $0x28] sm:$0xff]
    %v56 = vld [vmem:[#allocation7 + $0x30] sm:$0xff]
    %v57 = vld [vmem:[#allocation7 + $0x38] sm:$0xff]
    %v58 = vld [vmem:[#allocation7 + $0x40] sm:$0xff]
    %v59 = vld [vmem:[#allocation7 + $0x48] sm:$0xff]
    %v60 = vld [vmem:[#allocation7 + $0x50] sm:$0xff]
    %v61 = vld [vmem:[#allocation7 + $0x58] sm:$0xff]
    %v62 = vld [vmem:[#allocation7 + $0x60] sm:$0xff]
    %v63 = vld [vmem:[#allocation7 + $0x68] sm:$0xff]
    %v64 = vld [vmem:[#allocation7 + $0x70] sm:$0xff]
    %v65 = vld [vmem:[#allocation7 + $0x78] sm:$0xff]
    %v66 = vld [vmem:[#allocation7 + $0x80] sm:$0xff]
    %v67 = vld [vmem:[#allocation7 + $0x88] sm:$0xff]
    %v68 = vld [vmem:[#allocation7 + $0x90] sm:$0xff]
    %v69 = vld [vmem:[#allocation7 + $0x98] sm:$0xff]
    %v70 = vld [vmem:[#allocation7 + $0xa0] sm:$0xff]
    %v71 = vld [vmem:[#allocation7 + $0xa8] sm:$0xff]
    %v72 = vld [vmem:[#allocation7 + $0xb0] sm:$0xff]
    %v73 = vld [vmem:[#allocation7 + $0xb8] sm:$0xff]
    %v74 = vld [vmem:[#allocation7 + $0xc0] sm:$0xff]
    %v75 = vld [vmem:[#allocation7 + $0xc8] sm:$0xff]
    %v76 = vld [vmem:[#allocation7 + $0xd0] sm:$0xff]
    %v77 = vld [vmem:[#allocation7 + $0xd8] sm:$0xff]
    %v78 = vld [vmem:[#allocation7 + $0xe0] sm:$0xff]
    %v79 = vld [vmem:[#allocation7 + $0xe8] sm:$0xff]
    %v80 = vld [vmem:[#allocation7 + $0xf0] sm:$0xff]
    %v81 = vld [vmem:[#allocation7 + $0xf8] sm:$0xff]
    %v82 = vld [vmem:[#allocation2] sm:$0xff]
    %v83 = vadd.f32 %v48, %v49
    %84 = vadd.xlane.f32.xlu0 %v83
    %v85 = vpop.xlane.xlu0 %84
    %v86 = vadd.f32 %v82, %v85
    %vm87 = vcmask 7168
    %88 = vst.msk [vmem:[#allocation2] sm:$0xff] %vm87, %v86
    %v89 = vld [vmem:[#allocation3] sm:$0xff]
    %90 = vmatprep.subr.mxu0 %v51
    %91 = vmatpush1.xpose.msra.mxu0 %v50
    %92 = vmatprep.subr.mxu0 %v53
    %93 = vmatpush1.xpose.msra.mxu0 %v52
    %94 = vmatprep.subr.mxu0 %v55
    %95 = vmatpush1.xpose.msra.mxu0 %v54
    %96 = vmatprep.subr.mxu0 %v57
    %97 = vmatpush1.xpose.msra.mxu0 %v56
    %98 = vmatprep.subr.mxu0 %v59
    %99 = vmatpush1.xpose.msra.mxu0 %v58
    %100 = vmatprep.subr.mxu0 %v61
    %101 = vmatpush1.xpose.msra.mxu0 %v60
    %102 = vmatprep.subr.mxu0 %v63
    %103 = vmatpush1.xpose.msra.mxu0 %v62
    %104 = vmatprep.subr.mxu0 %v65
    %105 = vmatpush1.xpose.msra.mxu0 %v64
    %106 = vmatprep.subr.mxu0 %v67
    %107 = vmatpush1.xpose.msra.mxu0 %v66
    %108 = vmatprep.subr.mxu0 %v69
    %109 = vmatpush1.xpose.msra.mxu0 %v68
    %110 = vmatprep.subr.mxu0 %v71
    %111 = vmatpush1.xpose.msra.mxu0 %v70
    %112 = vmatprep.subr.mxu0 %v73
    %113 = vmatpush1.xpose.msra.mxu0 %v72
    %114 = vmatprep.subr.mxu0 %v75
    %115 = vmatpush1.xpose.msra.mxu0 %v74
    %116 = vmatprep.subr.mxu0 %v77
    %117 = vmatpush1.xpose.msra.mxu0 %v76
    %118 = vmatprep.subr.mxu0 %v79
    %119 = vmatpush1.xpose.msra.mxu0 %v78
    %120 = vmatprep.subr.mxu0 %v81
    %121 = vmatpush1.xpose.msra.mxu0 %v80
    %122 = vmatprep.subr.mxu0 0.0
    %123 = vmatpush1.xpose.msra.mxu0 0.0
    %124 = vmatprep.subr.mxu0 0.0
    %125 = vmatpush1.xpose.msra.mxu0 0.0
    %126 = vmatprep.subr.mxu0 0.0
    %127 = vmatpush1.xpose.msra.mxu0 0.0
    %128 = vmatprep.subr.mxu0 0.0
    %129 = vmatpush1.xpose.msra.mxu0 0.0
    %130 = vmatprep.subr.mxu0 0.0
    %131 = vmatpush1.xpose.msra.mxu0 0.0
    %132 = vmatprep.subr.mxu0 0.0
    %133 = vmatpush1.xpose.msra.mxu0 0.0
    %134 = vmatprep.subr.mxu0 0.0
    %135 = vmatpush1.xpose.msra.mxu0 0.0
    %136 = vmatprep.subr.mxu0 0.0
    %137 = vmatpush1.xpose.msra.mxu0 0.0
    %138 = vmatprep.subr.mxu0 0.0
    %139 = vmatpush1.xpose.msra.mxu0 0.0
    %140 = vmatprep.subr.mxu0 0.0
    %141 = vmatpush1.xpose.msra.mxu0 0.0
    %142 = vmatprep.subr.mxu0 0.0
    %143 = vmatpush1.xpose.msra.mxu0 0.0
    %144 = vmatprep.subr.mxu0 0.0
    %145 = vmatpush1.xpose.msra.mxu0 0.0
    %146 = vmatprep.subr.mxu0 0.0
    %147 = vmatpush1.xpose.msra.mxu0 0.0
    %148 = vmatprep.subr.mxu0 0.0
    %149 = vmatpush1.xpose.msra.mxu0 0.0
    %150 = vmatprep.subr.mxu0 0.0
    %151 = vmatpush1.xpose.msra.mxu0 0.0
    %152 = vmatprep.subr.mxu0 0.0
    %153 = vmatpush1.xpose.msra.mxu0 0.0
    %154 = vmatprep.mubr.f32.mxu0 1.0
    %155 = vmatmul.mubr.f32.gmra.mrb[0].mxu0 1.0
    %v156 = vpop.f32.mrb[0].mxu0
    %v157 = vadd.f32 0.0, %v156
    %v158 = vpop.f32.mrb[0].mxu0
    %159 = vdwg.mxu0
    %v160 = vadd.f32 %v89, %v157
    %161 = vst [vmem:[#allocation3] sm:$0xff] %v160
    // Predicated region
    $region26: #{tpu_custom_call.1} parent=1 // pred_check
      %p162 = pneg %p41
    $region27: #{tpu_custom_call.1} parent=1 // pred_check_branch
      %164 = sbr.rel (%p162) target = $region29
    $region28: #{tpu_custom_call.1} parent=1 // pred_region
      %v165 = vld [vmem:[#allocation2] sm:$0xff]
      %v166 = vld [vmem:[#allocation3] sm:$0x1]
      %168 = vset.pattern.permute.xlu0 0
      %169 = vperm.xlu0 %168, %v165
      %v170 = vpop.permute.xlu0 %169
      %v172 = vlaneseq
      %v173 = vshrl.u32 %v172, 7
      %v174 = vsub.s32 0, %v173
      %v175 = vrot.slane %v166, %v174
      %v176 = vadd.f32 %v170, %v175
      %v177 = vld [vmem:[%s2] sm:$0x1]
      %v179 = vlaneseq
      %v180 = vshrl.u32 %v179, 7
      %v181 = vsub.s32 0, %v180
      %v182 = vrot.slane %v177, %v181
      %v184 = vmul.f32 %v176, %v182
      %185 = vst [vmem:[#allocation9] sm:$0xff] %v184
    $region29: #{tpu_custom_call.1} parent=1 // pred_fallthru
      _
    // Predicated region
    $region30: #{tpu_custom_call.1} parent=1 // pred_check
      _
    $region31: #{tpu_custom_call.1} parent=1 // pred_check_branch
      %187 = sbr.rel (0) target = $region33
    $region32: #{tpu_custom_call.1} parent=1 // pred_region
      %s189 = ssub.s32 128, 128
      %190 = vsyncadd [#allocation6], %s189
      %s192 = sshll.u32 [#allocation9], 4
      %s193 = int_to_ptr.vmem [resolvable:$true] %s192
      %195 = dma.vmem_to_hbm [thread:$0]  %s193, 128, %s3, [#allocation6]
    $region33: #{tpu_custom_call.1} parent=1 // pred_fallthru
      _
    // Predicated region
    $region34: #{tpu_custom_call.1} parent=1 // pred_check
      _
    $region35: #{tpu_custom_call.1} parent=1 // pred_check_branch
      %197 = sbr.rel (0) target = $region37
    $region36: #{tpu_custom_call.1} parent=1 // pred_region
      %198 = dma.done [#allocation6], 128
    $region37: #{tpu_custom_call.1} parent=1 // pred_fallthru
      _
    %199 = vsyncpa [#allocation5], 1
    %200 = vsyncpa [#allocation8], 1
    %201 = vsyncpa [#allocation6], 1

</llo_original>
